<compile_context>
chip_gen: v7x
topology: tpu7x:2x2x1
jax: 0.10.0
libtpu: 0.0.40
codegen_flags: <defaults>
</compile_context>

<pallas_src>
import jax
import jax.numpy as jnp
from jax.experimental import pallas as pl
from jax.experimental.pallas import tpu as pltpu


_MAX_LANES = 1024           # widest lane-dense minor dim (multiple of 128)
_BLOCK_ELEMS = 512 * 1024   # ~2 MiB f32 per stream per block


def _mix_kernel(sig_a_ref, sig_b_ref, mix_a_ref, mix_b_ref, out_ref):
    # Fused elementwise multiply-add on the VPU:
    #   out = mix_a * signal_a + mix_b * signal_b
    out_ref[...] = (mix_a_ref[...] * sig_a_ref[...]
                    + mix_b_ref[...] * sig_b_ref[...]).astype(out_ref.dtype)


@jax.jit
def mix_forward(signal_a, signal_b, mix_a, mix_b):
    """Pallas implementation of Mix.forward.

    signal_a, signal_b : [B, T]
    mix_a, mix_b       : [B, T, 1]
    returns            : [B, T]  (dtype = promoted dtype of the four inputs)
    """
    B, T = signal_a.shape
    assert signal_b.shape == (B, T)
    assert mix_a.shape == (B, T, 1) and mix_b.shape == (B, T, 1)

    out_dtype = jnp.result_type(signal_a.dtype, signal_b.dtype,
                                mix_a.dtype, mix_b.dtype)
    N = B * T

    # --- slab geometry -----------------------------------------------------
    # lanes: largest of {1024, 512, 256, 128} dividing N -> zero padding.
    # Otherwise pad the flat stream to the next multiple of _MAX_LANES.
    lanes = None
    for cand in (1024, 512, 256, 128):
        if N % cand == 0:
            lanes = cand
            n_slab = N
            break
    if lanes is None:
        lanes = _MAX_LANES
        n_slab = lanes * pl.cdiv(N, lanes)

    rows = n_slab // lanes
    # ~2 MiB (f32) per block; row count multiple of 32 (legal for any dtype
    # packing) unless the block is the full row extent.
    target_rows = max(32, (_BLOCK_ELEMS // lanes) // 32 * 32)
    block_rows = target_rows if rows >= target_rows else rows
    grid = (pl.cdiv(rows, block_rows),)   # last block may be ragged (masked)

    # --- stream plumbing (metadata-only reshapes on the common path) --------
    flats = [jnp.reshape(x, (N,)) for x in (signal_a, signal_b, mix_a, mix_b)]
    if n_slab != N:
        # Ragged tail (N not a multiple of 128): pad each stream up to the
        # next multiple of `lanes` only.  This still costs one extra copy of
        # the inputs, but audio frame counts are normally 128-aligned so this
        # path is the exception, not the rule.
        flats = [jnp.pad(x, (0, n_slab - N)) for x in flats]
    slabs = [jnp.reshape(x, (rows, lanes)) for x in flats]

    spec = pl.BlockSpec((block_rows, lanes), lambda i: (i, 0))

    bytes_accessed = N * (signal_a.dtype.itemsize + signal_b.dtype.itemsize
                          + mix_a.dtype.itemsize + mix_b.dtype.itemsize
                          + jnp.dtype(out_dtype).itemsize)

    out_slab = pl.pallas_call(
        _mix_kernel,
        out_shape=jax.ShapeDtypeStruct((rows, lanes), out_dtype),
        grid_spec=pltpu.PrefetchScalarGridSpec(
            num_scalar_prefetch=0,
            grid=grid,
            in_specs=[spec, spec, spec, spec],
            out_specs=spec,
        ),
        compiler_params=pltpu.CompilerParams(
            dimension_semantics=("parallel",),    # independent row blocks
            vmem_limit_bytes=48 * 1024 * 1024,    # ~20 MiB used + headroom
        ),
        cost_estimate=pl.CostEstimate(
            flops=3 * N,                  # 2 mul + 1 add per element
            transcendentals=0,
            bytes_accessed=bytes_accessed,
        ),
    )(*slabs)

    out_flat = jnp.reshape(out_slab, (n_slab,))
    if n_slab != N:
        out_flat = out_flat[:N]
    return jnp.reshape(out_flat, (B, T))


def mix_reference(signal_a, signal_b, mix_a, mix_b):
    return mix_a[:, :, 0] * signal_a + mix_b[:, :, 0] * signal_b


if __name__ == "__main__":
    key = jax.random.PRNGKey(0)

    cases = [
        ((2, 4096), jnp.float32),    # single block, no pad, no slice
        ((2, 307200), jnp.float32),  # multi-block grid, ragged boundary rows (no pad)
        ((3, 333), jnp.float32),     # ragged tail -> small pad + slice path
        ((2, 4096), jnp.bfloat16),   # packed sublane dtype
    ]

    for (B, T), dtype in cases:
        k1, k2, k3, k4, key = jax.random.split(key, 5)

        signal_a = jax.random.uniform(k1, (B, T), jnp.float32, -1.0, 1.0).astype(dtype)
        signal_b = jax.random.uniform(k2, (B, T), jnp.float32, -1.0, 1.0).astype(dtype)
        # mix gains in [0, 1] with trailing size-1 dim, as the module expects.
        mix_a = jax.random.uniform(k3, (B, T, 1), jnp.float32, 0.0, 1.0).astype(dtype)
        mix_b = jax.random.uniform(k4, (B, T, 1), jnp.float32, 0.0, 1.0).astype(dtype)

        out = mix_forward(signal_a, signal_b, mix_a, mix_b)
        jax.block_until_ready(out)

        ref = mix_reference(signal_a, signal_b, mix_a, mix_b)
        assert out.shape == (B, T)
        assert out.dtype == ref.dtype
        tol = 1e-6 if dtype == jnp.float32 else 2e-2
        assert jnp.allclose(out.astype(jnp.float32), ref.astype(jnp.float32),
                            atol=tol, rtol=tol), (B, T, dtype)

    print("KERNEL_OK")
</pallas_src>

<mosaic_0001>
module attributes {stable_mosaic.version = 11 : i64} {
  func.func @_mix_kernel(%arg0: i32, %arg1: memref<8x1024xf32, #tpu.memory_space<vmem>>, %arg2: memref<8x1024xf32, #tpu.memory_space<vmem>>, %arg3: memref<8x1024xf32, #tpu.memory_space<vmem>>, %arg4: memref<8x1024xf32, #tpu.memory_space<vmem>>, %arg5: memref<8x1024xf32, #tpu.memory_space<vmem>>) attributes {dimension_semantics = [#tpu.dimension_semantics<parallel>], iteration_bounds = array<i64: 1>, scalar_prefetch = 0 : i64, scratch_operands = 0 : i64, tpu.core_type = #tpu.core_type<tc>, window_params = [{transform_indices = @transform_0, window_bounds = array<i64: 8, 1024>}, {transform_indices = @transform_1, window_bounds = array<i64: 8, 1024>}, {transform_indices = @transform_2, window_bounds = array<i64: 8, 1024>}, {transform_indices = @transform_3, window_bounds = array<i64: 8, 1024>}, {transform_indices = @transform_4, window_bounds = array<i64: 8, 1024>}]} {
    %c0 = arith.constant 0 : index
    %c0_0 = arith.constant 0 : index
    %0 = vector.load %arg3[%c0, %c0_0] : memref<8x1024xf32, #tpu.memory_space<vmem>>, vector<8x1024xf32>
    %c0_1 = arith.constant 0 : index
    %c0_2 = arith.constant 0 : index
    %1 = vector.load %arg1[%c0_1, %c0_2] : memref<8x1024xf32, #tpu.memory_space<vmem>>, vector<8x1024xf32>
    %2 = arith.mulf %0, %1 : vector<8x1024xf32>
    %c0_3 = arith.constant 0 : index
    %c0_4 = arith.constant 0 : index
    %3 = vector.load %arg4[%c0_3, %c0_4] : memref<8x1024xf32, #tpu.memory_space<vmem>>, vector<8x1024xf32>
    %c0_5 = arith.constant 0 : index
    %c0_6 = arith.constant 0 : index
    %4 = vector.load %arg2[%c0_5, %c0_6] : memref<8x1024xf32, #tpu.memory_space<vmem>>, vector<8x1024xf32>
    %5 = arith.mulf %3, %4 : vector<8x1024xf32>
    %6 = arith.addf %2, %5 : vector<8x1024xf32>
    %c0_7 = arith.constant 0 : index
    %c0_8 = arith.constant 0 : index
    %7 = vector.load %arg5[%c0_7, %c0_8] : memref<8x1024xf32, #tpu.memory_space<vmem>>, vector<8x1024xf32>
    tpu.vector_store %arg5[%c0_7, %c0_8], %6 {strides = array<i32>} : memref<8x1024xf32, #tpu.memory_space<vmem>>, vector<8x1024xf32>,
    return
  }
  func.func @transform_0(%arg0: i32) -> (i32, i32) {
    %c0_i32 = arith.constant 0 : i32
    %c0_i32_0 = arith.constant 0 : i32
    return %arg0, %c0_i32 : i32, i32
  }
  func.func @transform_1(%arg0: i32) -> (i32, i32) {
    %c0_i32 = arith.constant 0 : i32
    %c0_i32_0 = arith.constant 0 : i32
    return %arg0, %c0_i32 : i32, i32
  }
  func.func @transform_2(%arg0: i32) -> (i32, i32) {
    %c0_i32 = arith.constant 0 : i32
    %c0_i32_0 = arith.constant 0 : i32
    return %arg0, %c0_i32 : i32, i32
  }
  func.func @transform_3(%arg0: i32) -> (i32, i32) {
    %c0_i32 = arith.constant 0 : i32
    %c0_i32_0 = arith.constant 0 : i32
    return %arg0, %c0_i32 : i32, i32
  }
  func.func @transform_4(%arg0: i32) -> (i32, i32) {
    %c0_i32 = arith.constant 0 : i32
    %c0_i32_0 = arith.constant 0 : i32
    return %arg0, %c0_i32 : i32, i32
  }
}

</mosaic_0001>

<llo_original>
// kernel: mix_forward.1
$region0: #{mix_forward.1}
  #allocation0 [shape = 'u32[]', space=smem, size = 0x4, offset = 0x4, fixed_abs, tag = 'smem constant byte address 0x4 - core index']
  #allocation1 [shape = 'u32[144,128]{1,0:T(1,128)}', space=vmem, size = 0x12000, scoped, tag = 'internal scratch']
  %s0 = inlined_call_operand.vmem [shape: f32[8,1024], index: 0, kind: input, shape index: {}]
  %s1 = inlined_call_operand.vmem [shape: f32[8,1024], index: 1, kind: input, shape index: {}]
  %s2 = inlined_call_operand.vmem [shape: f32[8,1024], index: 2, kind: input, shape index: {}]
  %s3 = inlined_call_operand.vmem [shape: f32[8,1024], index: 3, kind: input, shape index: {}]
  %s4 = inlined_call_operand.vmem [shape: f32[8,1024], index: 4, kind: output, shape index: {}]
  %s5 = sld [smem:[#allocation0]]
  $region26: #{mix_forward.1} parent=0
    _
  %s7 = ssub.s32 1, %s5
  %s8 = scalar_select 0, %s7, %s5
  // Predicated region
  $region2: #{mix_forward.1} parent=0 // pred_check
    _
  $region3: #{mix_forward.1} parent=0 // pred_check_branch
    %10 = sbr.rel (0) target = $region5
  $region4: #{mix_forward.1} parent=0 // pred_region
    _
  $region5: #{mix_forward.1} parent=0 // pred_fallthru
    _
  // Predicated region
  $region6: #{mix_forward.1} parent=0 // pred_check
    _
  $region7: #{mix_forward.1} parent=0 // pred_check_branch
    %12 = sbr.rel (0) target = $region9
  $region8: #{mix_forward.1} parent=0 // pred_region
    _
  $region9: #{mix_forward.1} parent=0 // pred_fallthru
    _
  // Predicated region
  $region10: #{mix_forward.1} parent=0 // pred_check
    _
  $region11: #{mix_forward.1} parent=0 // pred_check_branch
    %14 = sbr.rel (0) target = $region13
  $region12: #{mix_forward.1} parent=0 // pred_region
    _
  $region13: #{mix_forward.1} parent=0 // pred_fallthru
    _
  // Predicated region
  $region14: #{mix_forward.1} parent=0 // pred_check
    _
  $region15: #{mix_forward.1} parent=0 // pred_check_branch
    %16 = sbr.rel (0) target = $region17
  $region16: #{mix_forward.1} parent=0 // pred_region
    _
  $region17: #{mix_forward.1} parent=0 // pred_fallthru
    _
  %v17 = vld [vmem:[%s2] sm:$0xff]
  %v18 = vld [vmem:[%s2 + $0x8] sm:$0xff]
  %v19 = vld [vmem:[%s2 + $0x10] sm:$0xff]
  %v20 = vld [vmem:[%s2 + $0x18] sm:$0xff]
  %v21 = vld [vmem:[%s2 + $0x20] sm:$0xff]
  %v22 = vld [vmem:[%s2 + $0x28] sm:$0xff]
  %v23 = vld [vmem:[%s2 + $0x30] sm:$0xff]
  %v24 = vld [vmem:[%s2 + $0x38] sm:$0xff]
  %v25 = vld [vmem:[%s0] sm:$0xff]
  %v26 = vld [vmem:[%s0 + $0x8] sm:$0xff]
  %v27 = vld [vmem:[%s0 + $0x10] sm:$0xff]
  %v28 = vld [vmem:[%s0 + $0x18] sm:$0xff]
  %v29 = vld [vmem:[%s0 + $0x20] sm:$0xff]
  %v30 = vld [vmem:[%s0 + $0x28] sm:$0xff]
  %v31 = vld [vmem:[%s0 + $0x30] sm:$0xff]
  %v32 = vld [vmem:[%s0 + $0x38] sm:$0xff]
  %v33 = vmul.f32 %v17, %v25
  %v34 = vmul.f32 %v18, %v26
  %v35 = vmul.f32 %v19, %v27
  %v36 = vmul.f32 %v20, %v28
  %v37 = vmul.f32 %v21, %v29
  %v38 = vmul.f32 %v22, %v30
  %v39 = vmul.f32 %v23, %v31
  %v40 = vmul.f32 %v24, %v32
  %v41 = vld [vmem:[%s3] sm:$0xff]
  %v42 = vld [vmem:[%s3 + $0x8] sm:$0xff]
  %v43 = vld [vmem:[%s3 + $0x10] sm:$0xff]
  %v44 = vld [vmem:[%s3 + $0x18] sm:$0xff]
  %v45 = vld [vmem:[%s3 + $0x20] sm:$0xff]
  %v46 = vld [vmem:[%s3 + $0x28] sm:$0xff]
  %v47 = vld [vmem:[%s3 + $0x30] sm:$0xff]
  %v48 = vld [vmem:[%s3 + $0x38] sm:$0xff]
  %v49 = vld [vmem:[%s1] sm:$0xff]
  %v50 = vld [vmem:[%s1 + $0x8] sm:$0xff]
  %v51 = vld [vmem:[%s1 + $0x10] sm:$0xff]
  %v52 = vld [vmem:[%s1 + $0x18] sm:$0xff]
  %v53 = vld [vmem:[%s1 + $0x20] sm:$0xff]
  %v54 = vld [vmem:[%s1 + $0x28] sm:$0xff]
  %v55 = vld [vmem:[%s1 + $0x30] sm:$0xff]
  %v56 = vld [vmem:[%s1 + $0x38] sm:$0xff]
  %v57 = vmul.f32 %v41, %v49
  %v58 = vmul.f32 %v42, %v50
  %v59 = vmul.f32 %v43, %v51
  %v60 = vmul.f32 %v44, %v52
  %v61 = vmul.f32 %v45, %v53
  %v62 = vmul.f32 %v46, %v54
  %v63 = vmul.f32 %v47, %v55
  %v64 = vmul.f32 %v48, %v56
  %v65 = vadd.f32 %v33, %v57
  %v66 = vadd.f32 %v34, %v58
  %v67 = vadd.f32 %v35, %v59
  %v68 = vadd.f32 %v36, %v60
  %v69 = vadd.f32 %v37, %v61
  %v70 = vadd.f32 %v38, %v62
  %v71 = vadd.f32 %v39, %v63
  %v72 = vadd.f32 %v40, %v64
  %73 = vst [vmem:[%s4] sm:$0xff] %v65
  %74 = vst [vmem:[%s4 + $0x8] sm:$0xff] %v66
  %75 = vst [vmem:[%s4 + $0x10] sm:$0xff] %v67
  %76 = vst [vmem:[%s4 + $0x18] sm:$0xff] %v68
  %77 = vst [vmem:[%s4 + $0x20] sm:$0xff] %v69
  %78 = vst [vmem:[%s4 + $0x28] sm:$0xff] %v70
  %79 = vst [vmem:[%s4 + $0x30] sm:$0xff] %v71
  %80 = vst [vmem:[%s4 + $0x38] sm:$0xff] %v72
  // Predicated region
  $region18: #{mix_forward.1} parent=0 // pred_check
    _
  $region19: #{mix_forward.1} parent=0 // pred_check_branch
    %82 = sbr.rel (0) target = $region21
  $region20: #{mix_forward.1} parent=0 // pred_region
    _
  $region21: #{mix_forward.1} parent=0 // pred_fallthru
    _
  // Predicated region
  $region22: #{mix_forward.1} parent=0 // pred_check
    _
  $region23: #{mix_forward.1} parent=0 // pred_check_branch
    %84 = sbr.rel (0) target = $region25
  $region24: #{mix_forward.1} parent=0 // pred_region
    _
  $region25: #{mix_forward.1} parent=0 // pred_fallthru
    _

</llo_original>
